<compile_context>
chip_gen: v7x
topology: tpu7x:2x2x1
jax: 0.10.0
libtpu: 0.0.40
codegen_flags: <defaults>
</compile_context>

<pallas_src>
import functools

import jax
import jax.numpy as jnp
import numpy as np
from jax import lax
from jax.experimental import pallas as pl
from jax.experimental.pallas import tpu as pltpu


def _contrastive_item_loss_kernel(logits_ref, idx_ref, out_ref, *,
                                  num_pos, num_neg, batch_size, block_rows,
                                  needs_mask):
    """One grid step == `block_rows` batch rows.  Writes one f32 partial sum."""
    logits = logits_ref[...].astype(jnp.float32)            # (TB, I), cast on load
    idx = idx_ref[...]                                       # (TB, PI+NI) int32, one load
    tb, num_items = logits.shape

    # Lane-dense gather: one lane-iota over the item axis (hoisted), compared
    # against each requested index column, selected against the logits and
    # lane-reduced on the XLU.  PI+NI is tiny -> static unrolled loop.
    lane_iota = lax.broadcasted_iota(jnp.int32, (tb, num_items), 1)

    def gather_col(j):
        hit = lane_iota == idx[:, j:j + 1]                   # (TB, I) bool
        return jnp.sum(jnp.where(hit, logits, 0.0), axis=1, keepdims=True)  # (TB, 1)

    pos_l = jnp.concatenate([gather_col(j) for j in range(num_pos)], axis=1)            # (TB, PI)
    neg_l = jnp.concatenate([gather_col(num_pos + j) for j in range(num_neg)], axis=1)  # (TB, NI)

    # BPR pairs: -log(sigmoid(pos - neg)) == softplus(neg - pos), stable form.
    x = neg_l[:, None, :] - pos_l[:, :, None]                # (TB, PI, NI)
    loss = jnp.maximum(x, 0.0) + jnp.log1p(jnp.exp(-jnp.abs(x)))

    if needs_mask:
        base = pl.program_id(0) * block_rows
        rows = base + lax.broadcasted_iota(jnp.int32, (tb, 1), 0)
        valid = rows < batch_size                            # (TB, 1)
        loss = jnp.where(valid[:, :, None], loss, 0.0)       # select: garbage rows -> 0

    out_ref[...] = jnp.sum(loss, axis=(0, 1, 2), keepdims=True)   # (1, 1, 1) partial sum


def sequence_recommender_contrastive_item_loss(logits, positive_items, negative_items,
                                               reduction: str = "elementwise_mean",
                                               block_rows: int | None = None):
    """logits: (N, I) float; positive_items: (N, PI) int; negative_items: (N, NI) int."""
    N, I = logits.shape
    _, PI = positive_items.shape
    _, NI = negative_items.shape

    # Fuse the (tiny) index arrays into one lane-dense (N, PI+NI) int32 array.
    items = jnp.concatenate(
        [positive_items.astype(jnp.int32), negative_items.astype(jnp.int32)], axis=1)

    if block_rows is None:
        # Size the batch tile so the double-buffered logits stream plus the in-kernel
        # f32 working set stays well inside every chip's VMEM (v7x: 64 MiB physical).
        row_bytes = I * max(logits.dtype.itemsize, 4)         # f32 working copy dominates
        tb = max(1, (2 * 1024 * 1024) // row_bytes)           # ~2 MiB of rows per buffer
        tb = min(tb, 512)
    else:
        tb = block_rows
    if tb >= N:
        tb = N                                                # full-extent block is allowed
    else:
        tb = max(8, (tb // 8) * 8)                            # keep (8, 128)-friendly

    num_blocks = pl.cdiv(N, tb)
    needs_mask = (N % tb) != 0

    kernel = functools.partial(
        _contrastive_item_loss_kernel,
        num_pos=PI, num_neg=NI, batch_size=N, block_rows=tb, needs_mask=needs_mask)

    partial_sums = pl.pallas_call(
        kernel,
        out_shape=jax.ShapeDtypeStruct((num_blocks, 1, 1), jnp.float32),
        grid_spec=pltpu.PrefetchScalarGridSpec(
            num_scalar_prefetch=0,
            grid=(num_blocks,),
            in_specs=[
                pl.BlockSpec((tb, I), lambda i: (i, 0)),          # logits, native dtype
                pl.BlockSpec((tb, PI + NI), lambda i: (i, 0)),    # fused pos/neg indices
            ],
            out_specs=pl.BlockSpec((1, 1, 1), lambda i: (i, 0, 0)),
        ),
        compiler_params=pltpu.CompilerParams(
            dimension_semantics=("parallel",),     # independent partial sums -> megacore OK
            vmem_limit_bytes=32 * 1024 * 1024),
    )(logits, items)

    total = jnp.sum(partial_sums)
    if reduction == "elementwise_mean":
        return total / jnp.float32(N * PI * NI)
    return total   # 'sum'
    # TODO(synk): for very large item catalogs, additionally block the I axis and
    # accumulate the gathered logits across I-blocks.


def _reference_loss(logits, positive_items, negative_items, reduction="elementwise_mean"):
    lg = logits.astype(jnp.float32)
    pos_l = jnp.take_along_axis(lg, positive_items, axis=1)   # (N, PI)
    neg_l = jnp.take_along_axis(lg, negative_items, axis=1)   # (N, NI)
    diff = pos_l[:, :, None] - neg_l[:, None, :]              # (N, PI, NI)
    l = jax.nn.softplus(-diff)
    return jnp.mean(l) if reduction == "elementwise_mean" else jnp.sum(l)


if __name__ == "__main__":
    key = jax.random.PRNGKey(0)
    k_log, k_pos, k_neg = jax.random.split(key, 3)

    N, I, PI, NI = 20, 128, 4, 6   # batch, num items, num positives, num negatives
    logits = jax.random.normal(k_log, (N, I), dtype=jnp.float32)
    positive_items = jax.random.randint(k_pos, (N, PI), 0, I, dtype=jnp.int32)
    negative_items = jax.random.randint(k_neg, (N, NI), 0, I, dtype=jnp.int32)

    ref = jax.block_until_ready(_reference_loss(logits, positive_items, negative_items))

    # Default tiling: single block (TB == N).
    loss = jax.block_until_ready(
        sequence_recommender_contrastive_item_loss(logits, positive_items, negative_items))
    np.testing.assert_allclose(np.asarray(loss), np.asarray(ref), rtol=1e-5, atol=1e-6)

    # Forced small batch tile: multiple grid blocks + masked partial last block.
    loss_blk = jax.block_until_ready(
        sequence_recommender_contrastive_item_loss(logits, positive_items, negative_items,
                                                   block_rows=8))
    np.testing.assert_allclose(np.asarray(loss_blk), np.asarray(ref), rtol=1e-5, atol=1e-6)

    # Native bf16 logits path (cast to f32 happens on load inside the kernel).
    logits_bf16 = logits.astype(jnp.bfloat16)
    ref_bf16 = jax.block_until_ready(
        _reference_loss(logits_bf16, positive_items, negative_items))
    loss_bf16 = jax.block_until_ready(
        sequence_recommender_contrastive_item_loss(logits_bf16, positive_items, negative_items))
    np.testing.assert_allclose(np.asarray(loss_bf16), np.asarray(ref_bf16),
                               rtol=1e-4, atol=1e-5)

    print("KERNEL_OK")
</pallas_src>

<mosaic_0001>
module attributes {stable_mosaic.version = 11 : i64} {
  func.func @_contrastive_item_loss_kernel(%arg0: i32, %arg1: memref<20x128xf32, #tpu.memory_space<vmem>>, %arg2: memref<20x10xi32, #tpu.memory_space<vmem>>, %arg3: memref<1x1x1xf32, #tpu.memory_space<vmem>>) attributes {dimension_semantics = [#tpu.dimension_semantics<parallel>], iteration_bounds = array<i64: 1>, scalar_prefetch = 0 : i64, scratch_operands = 0 : i64, tpu.core_type = #tpu.core_type<tc>, window_params = [{transform_indices = @transform_0, window_bounds = array<i64: 20, 128>}, {transform_indices = @transform_1, window_bounds = array<i64: 20, 10>}, {transform_indices = @transform_2, window_bounds = array<i64: 1, 1, 1>}]} {
    %c0 = arith.constant 0 : index
    %c0_0 = arith.constant 0 : index
    %0 = vector.load %arg1[%c0, %c0_0] : memref<20x128xf32, #tpu.memory_space<vmem>>, vector<20x128xf32>
    %c0_1 = arith.constant 0 : index
    %c0_2 = arith.constant 0 : index
    %1 = vector.load %arg2[%c0_1, %c0_2] : memref<20x10xi32, #tpu.memory_space<vmem>>, vector<20x10xi32>
    %2 = tpu.iota {dimensions = array<i32: 1>} : vector<20x128xi32>
    %3 = vector.extract_strided_slice %1 {offsets = [0, 0], sizes = [20, 1], strides = [1, 1]} : vector<20x10xi32> to vector<20x1xi32>
    %4 = vector.broadcast %3 : vector<20x1xi32> to vector<20x128xi32>
    %5 = arith.cmpi eq, %2, %4 : vector<20x128xi32>
    %cst = arith.constant 0.000000e+00 : f32
    %6 = vector.broadcast %cst : f32 to vector<20x128xf32>
    %7 = arith.select %5, %0, %6 : vector<20x128xi1>, vector<20x128xf32>
    %cst_3 = arith.constant dense<0.000000e+00> : vector<20xf32>
    %8 = vector.multi_reduction <add>, %7, %cst_3 [1] : vector<20x128xf32> to vector<20xf32>
    %9 = vector.shape_cast %8 : vector<20xf32> to vector<20x1xf32>
    %10 = vector.extract_strided_slice %1 {offsets = [0, 1], sizes = [20, 1], strides = [1, 1]} : vector<20x10xi32> to vector<20x1xi32>
    %11 = vector.broadcast %10 : vector<20x1xi32> to vector<20x128xi32>
    %12 = arith.cmpi eq, %2, %11 : vector<20x128xi32>
    %cst_4 = arith.constant 0.000000e+00 : f32
    %13 = vector.broadcast %cst_4 : f32 to vector<20x128xf32>
    %14 = arith.select %12, %0, %13 : vector<20x128xi1>, vector<20x128xf32>
    %cst_5 = arith.constant dense<0.000000e+00> : vector<20xf32>
    %15 = vector.multi_reduction <add>, %14, %cst_5 [1] : vector<20x128xf32> to vector<20xf32>
    %16 = vector.shape_cast %15 : vector<20xf32> to vector<20x1xf32>
    %17 = vector.extract_strided_slice %1 {offsets = [0, 2], sizes = [20, 1], strides = [1, 1]} : vector<20x10xi32> to vector<20x1xi32>
    %18 = vector.broadcast %17 : vector<20x1xi32> to vector<20x128xi32>
    %19 = arith.cmpi eq, %2, %18 : vector<20x128xi32>
    %cst_6 = arith.constant 0.000000e+00 : f32
    %20 = vector.broadcast %cst_6 : f32 to vector<20x128xf32>
    %21 = arith.select %19, %0, %20 : vector<20x128xi1>, vector<20x128xf32>
    %cst_7 = arith.constant dense<0.000000e+00> : vector<20xf32>
    %22 = vector.multi_reduction <add>, %21, %cst_7 [1] : vector<20x128xf32> to vector<20xf32>
    %23 = vector.shape_cast %22 : vector<20xf32> to vector<20x1xf32>
    %24 = vector.extract_strided_slice %1 {offsets = [0, 3], sizes = [20, 1], strides = [1, 1]} : vector<20x10xi32> to vector<20x1xi32>
    %25 = vector.broadcast %24 : vector<20x1xi32> to vector<20x128xi32>
    %26 = arith.cmpi eq, %2, %25 : vector<20x128xi32>
    %cst_8 = arith.constant 0.000000e+00 : f32
    %27 = vector.broadcast %cst_8 : f32 to vector<20x128xf32>
    %28 = arith.select %26, %0, %27 : vector<20x128xi1>, vector<20x128xf32>
    %cst_9 = arith.constant dense<0.000000e+00> : vector<20xf32>
    %29 = vector.multi_reduction <add>, %28, %cst_9 [1] : vector<20x128xf32> to vector<20xf32>
    %30 = vector.shape_cast %29 : vector<20xf32> to vector<20x1xf32>
    %31 = tpu.concatenate %9, %16, %23, %30 in 1 : vector<20x1xf32>, vector<20x1xf32>, vector<20x1xf32>, vector<20x1xf32> -> vector<20x4xf32>
    %32 = vector.extract_strided_slice %1 {offsets = [0, 4], sizes = [20, 1], strides = [1, 1]} : vector<20x10xi32> to vector<20x1xi32>
    %33 = vector.broadcast %32 : vector<20x1xi32> to vector<20x128xi32>
    %34 = arith.cmpi eq, %2, %33 : vector<20x128xi32>
    %cst_10 = arith.constant 0.000000e+00 : f32
    %35 = vector.broadcast %cst_10 : f32 to vector<20x128xf32>
    %36 = arith.select %34, %0, %35 : vector<20x128xi1>, vector<20x128xf32>
    %cst_11 = arith.constant dense<0.000000e+00> : vector<20xf32>
    %37 = vector.multi_reduction <add>, %36, %cst_11 [1] : vector<20x128xf32> to vector<20xf32>
    %38 = vector.shape_cast %37 : vector<20xf32> to vector<20x1xf32>
    %39 = vector.extract_strided_slice %1 {offsets = [0, 5], sizes = [20, 1], strides = [1, 1]} : vector<20x10xi32> to vector<20x1xi32>
    %40 = vector.broadcast %39 : vector<20x1xi32> to vector<20x128xi32>
    %41 = arith.cmpi eq, %2, %40 : vector<20x128xi32>
    %cst_12 = arith.constant 0.000000e+00 : f32
    %42 = vector.broadcast %cst_12 : f32 to vector<20x128xf32>
    %43 = arith.select %41, %0, %42 : vector<20x128xi1>, vector<20x128xf32>
    %cst_13 = arith.constant dense<0.000000e+00> : vector<20xf32>
    %44 = vector.multi_reduction <add>, %43, %cst_13 [1] : vector<20x128xf32> to vector<20xf32>
    %45 = vector.shape_cast %44 : vector<20xf32> to vector<20x1xf32>
    %46 = vector.extract_strided_slice %1 {offsets = [0, 6], sizes = [20, 1], strides = [1, 1]} : vector<20x10xi32> to vector<20x1xi32>
    %47 = vector.broadcast %46 : vector<20x1xi32> to vector<20x128xi32>
    %48 = arith.cmpi eq, %2, %47 : vector<20x128xi32>
    %cst_14 = arith.constant 0.000000e+00 : f32
    %49 = vector.broadcast %cst_14 : f32 to vector<20x128xf32>
    %50 = arith.select %48, %0, %49 : vector<20x128xi1>, vector<20x128xf32>
    %cst_15 = arith.constant dense<0.000000e+00> : vector<20xf32>
    %51 = vector.multi_reduction <add>, %50, %cst_15 [1] : vector<20x128xf32> to vector<20xf32>
    %52 = vector.shape_cast %51 : vector<20xf32> to vector<20x1xf32>
    %53 = vector.extract_strided_slice %1 {offsets = [0, 7], sizes = [20, 1], strides = [1, 1]} : vector<20x10xi32> to vector<20x1xi32>
    %54 = vector.broadcast %53 : vector<20x1xi32> to vector<20x128xi32>
    %55 = arith.cmpi eq, %2, %54 : vector<20x128xi32>
    %cst_16 = arith.constant 0.000000e+00 : f32
    %56 = vector.broadcast %cst_16 : f32 to vector<20x128xf32>
    %57 = arith.select %55, %0, %56 : vector<20x128xi1>, vector<20x128xf32>
    %cst_17 = arith.constant dense<0.000000e+00> : vector<20xf32>
    %58 = vector.multi_reduction <add>, %57, %cst_17 [1] : vector<20x128xf32> to vector<20xf32>
    %59 = vector.shape_cast %58 : vector<20xf32> to vector<20x1xf32>
    %60 = vector.extract_strided_slice %1 {offsets = [0, 8], sizes = [20, 1], strides = [1, 1]} : vector<20x10xi32> to vector<20x1xi32>
    %61 = vector.broadcast %60 : vector<20x1xi32> to vector<20x128xi32>
    %62 = arith.cmpi eq, %2, %61 : vector<20x128xi32>
    %cst_18 = arith.constant 0.000000e+00 : f32
    %63 = vector.broadcast %cst_18 : f32 to vector<20x128xf32>
    %64 = arith.select %62, %0, %63 : vector<20x128xi1>, vector<20x128xf32>
    %cst_19 = arith.constant dense<0.000000e+00> : vector<20xf32>
    %65 = vector.multi_reduction <add>, %64, %cst_19 [1] : vector<20x128xf32> to vector<20xf32>
    %66 = vector.shape_cast %65 : vector<20xf32> to vector<20x1xf32>
    %67 = vector.extract_strided_slice %1 {offsets = [0, 9], sizes = [20, 1], strides = [1, 1]} : vector<20x10xi32> to vector<20x1xi32>
    %68 = vector.broadcast %67 : vector<20x1xi32> to vector<20x128xi32>
    %69 = arith.cmpi eq, %2, %68 : vector<20x128xi32>
    %cst_20 = arith.constant 0.000000e+00 : f32
    %70 = vector.broadcast %cst_20 : f32 to vector<20x128xf32>
    %71 = arith.select %69, %0, %70 : vector<20x128xi1>, vector<20x128xf32>
    %cst_21 = arith.constant dense<0.000000e+00> : vector<20xf32>
    %72 = vector.multi_reduction <add>, %71, %cst_21 [1] : vector<20x128xf32> to vector<20xf32>
    %73 = vector.shape_cast %72 : vector<20xf32> to vector<20x1xf32>
    %74 = tpu.concatenate %38, %45, %52, %59, %66, %73 in 1 : vector<20x1xf32>, vector<20x1xf32>, vector<20x1xf32>, vector<20x1xf32>, vector<20x1xf32>, vector<20x1xf32> -> vector<20x6xf32>
    %75 = vector.shape_cast %74 : vector<20x6xf32> to vector<20x1x6xf32>
    %76 = vector.shape_cast %31 : vector<20x4xf32> to vector<20x4x1xf32>
    %77 = vector.broadcast %75 : vector<20x1x6xf32> to vector<20x4x6xf32>
    %78 = vector.broadcast %76 : vector<20x4x1xf32> to vector<20x4x6xf32>
    %79 = arith.subf %77, %78 : vector<20x4x6xf32>
    %cst_22 = arith.constant 0.000000e+00 : f32
    %80 = vector.broadcast %cst_22 : f32 to vector<20x4x6xf32>
    %81 = arith.maximumf %79, %80 : vector<20x4x6xf32>
    %82 = math.absf %79 : vector<20x4x6xf32>
    %cst_23 = arith.constant 0.000000e+00 : f32
    %83 = vector.broadcast %cst_23 : f32 to vector<20x4x6xf32>
    %84 = arith.subf %83, %82 : vector<20x4x6xf32>
    %85 = math.exp %84 : vector<20x4x6xf32>
    %86 = math.log1p %85 : vector<20x4x6xf32>
    %87 = arith.addf %81, %86 : vector<20x4x6xf32>
    %88 = vector.shape_cast %87 : vector<20x4x6xf32> to vector<1x20x4x6xf32>
    %cst_24 = arith.constant dense<0.000000e+00> : vector<1xf32>
    %89 = vector.multi_reduction <add>, %88, %cst_24 [1, 2, 3] : vector<1x20x4x6xf32> to vector<1xf32>
    %90 = vector.shape_cast %89 : vector<1xf32> to vector<1x1x1x1xf32>
    %91 = vector.extract %90[0, 0, 0, 0] : f32 from vector<1x1x1x1xf32>
    %92 = vector.broadcast %91 : f32 to vector<1x1x1xf32>
    %c0_25 = arith.constant 0 : index
    %c0_26 = arith.constant 0 : index
    %c0_27 = arith.constant 0 : index
    %93 = vector.load %arg3[%c0_25, %c0_26, %c0_27] : memref<1x1x1xf32, #tpu.memory_space<vmem>>, vector<1x1x1xf32>
    tpu.vector_store %arg3[%c0_25, %c0_26, %c0_27], %92 {strides = array<i32>} : memref<1x1x1xf32, #tpu.memory_space<vmem>>, vector<1x1x1xf32>,
    return
  }
  func.func @transform_0(%arg0: i32) -> (i32, i32) {
    %c0_i32 = arith.constant 0 : i32
    %c0_i32_0 = arith.constant 0 : i32
    return %arg0, %c0_i32 : i32, i32
  }
  func.func @transform_1(%arg0: i32) -> (i32, i32) {
    %c0_i32 = arith.constant 0 : i32
    %c0_i32_0 = arith.constant 0 : i32
    return %arg0, %c0_i32 : i32, i32
  }
  func.func @transform_2(%arg0: i32) -> (i32, i32, i32) {
    %c0_i32 = arith.constant 0 : i32
    %c0_i32_0 = arith.constant 0 : i32
    %c0_i32_1 = arith.constant 0 : i32
    return %arg0, %c0_i32, %c0_i32_0 : i32, i32, i32
  }
}

</mosaic_0001>

<llo_original>
// kernel: tpu_custom_call.1
$region0: #{tpu_custom_call.1}
  #allocation0 [shape = 'u32[]', space=smem, size = 0x4, offset = 0x4, fixed_abs, tag = 'smem constant byte address 0x4 - core index']
  #allocation1 [shape = 'u32[144,128]{1,0:T(1,128)}', space=vmem, size = 0x12000, scoped, tag = 'internal scratch']
  %s0 = inlined_call_operand.vmem [shape: f32[20,128], index: 0, kind: input, shape index: {}]
  %s1 = inlined_call_operand.vmem [shape: s32[20,10], index: 1, kind: input, shape index: {}]
  %s2 = inlined_call_operand.hbm [shape: f32[1,1,1], index: 2, kind: output, shape index: {}]
  %s3 = sld [smem:[#allocation0]]
  $region18: #{tpu_custom_call.1} parent=0
    _
  %s5 = ssub.s32 1, %s3
  %s6 = scalar_select 0, %s5, %s3
  $region1: #{tpu_custom_call.1} parent=0
    #allocation2 [shape = 'u8[512]{0}', space=vmem, size = 0x400, scoped, tag = 'output window, operand 0, single buffered']
    #allocation3 [shape = 's32[1]{0}', space=sflag, size = 0x4, scoped, tag = 'scoped memory for tpu_custom_call.1']
    %7 = vsyncpa [#allocation3], 0
    // Predicated region
    $region2: #{tpu_custom_call.1} parent=1 // pred_check
      _
    $region3: #{tpu_custom_call.1} parent=1 // pred_check_branch
      %9 = sbr.rel (0) target = $region5
    $region4: #{tpu_custom_call.1} parent=1 // pred_region
      _
    $region5: #{tpu_custom_call.1} parent=1 // pred_fallthru
      _
    // Predicated region
    $region6: #{tpu_custom_call.1} parent=1 // pred_check
      _
    $region7: #{tpu_custom_call.1} parent=1 // pred_check_branch
      %11 = sbr.rel (0) target = $region9
    $region8: #{tpu_custom_call.1} parent=1 // pred_region
      _
    $region9: #{tpu_custom_call.1} parent=1 // pred_fallthru
      _
    %v12 = vld [vmem:[%s0] sm:$0xff]
    %v13 = vld [vmem:[%s0 + $0x8] sm:$0xff]
    %v14 = vld [vmem:[%s0 + $0x10] sm:$0xf]
    %v15 = vld [vmem:[%s1] sm:$0xff]
    %v16 = vld [vmem:[%s1 + $0x8] sm:$0xff]
    %v17 = vld [vmem:[%s1 + $0x10] sm:$0xf]
    %v18 = vlaneseq
    %v19 = vand.u32 %v18, 127
    %20 = vset.pattern.permute.xlu0 0
    %21 = vperm.xlu0 %20, %v15
    %v22 = vpop.permute.xlu0 %21
    %23 = vset.pattern.permute.xlu0 0
    %24 = vperm.xlu0 %23, %v16
    %v25 = vpop.permute.xlu0 %24
    %26 = vset.pattern.permute.xlu0 0
    %27 = vperm.xlu0 %26, %v17
    %v28 = vpop.permute.xlu0 %27
    %vm29 = vcmp.eq.s32.totalorder %v19, %v22
    %vm30 = vcmp.eq.s32.totalorder %v19, %v25
    %vm31 = vcmp.eq.s32.totalorder %v19, %v28
    %v32 = vsel %vm29, %v12, 0.0
    %v33 = vsel %vm30, %v13, 0.0
    %v34 = vsel %vm31, %v14, 0.0
    %35 = vadd.xlane.f32.xlu0 %v32
    %v36 = vpop.xlane.xlu0 %35
    %37 = vadd.xlane.f32.xlu0 %v33
    %v38 = vpop.xlane.xlu0 %37
    %vm39 = vcmask 1043456
    %v40 = vsel %vm39, %v34, 0.0
    %41 = vadd.xlane.f32.xlu0 %v40
    %v42 = vpop.xlane.xlu0 %41
    %43 = vset.pattern.permute.xlu0 1
    %44 = vperm.xlu0 %43, %v15
    %v45 = vpop.permute.xlu0 %44
    %46 = vset.pattern.permute.xlu0 1
    %47 = vperm.xlu0 %46, %v16
    %v48 = vpop.permute.xlu0 %47
    %49 = vset.pattern.permute.xlu0 1
    %50 = vperm.xlu0 %49, %v17
    %v51 = vpop.permute.xlu0 %50
    %vm52 = vcmp.eq.s32.totalorder %v19, %v45
    %vm53 = vcmp.eq.s32.totalorder %v19, %v48
    %vm54 = vcmp.eq.s32.totalorder %v19, %v51
    %v55 = vsel %vm52, %v12, 0.0
    %v56 = vsel %vm53, %v13, 0.0
    %v57 = vsel %vm54, %v14, 0.0
    %58 = vadd.xlane.f32.xlu0 %v55
    %v59 = vpop.xlane.xlu0 %58
    %60 = vadd.xlane.f32.xlu0 %v56
    %v61 = vpop.xlane.xlu0 %60
    %v62 = vsel %vm39, %v57, 0.0
    %63 = vadd.xlane.f32.xlu0 %v62
    %v64 = vpop.xlane.xlu0 %63
    %65 = vset.pattern.permute.xlu0 2
    %66 = vperm.xlu0 %65, %v15
    %v67 = vpop.permute.xlu0 %66
    %68 = vset.pattern.permute.xlu0 2
    %69 = vperm.xlu0 %68, %v16
    %v70 = vpop.permute.xlu0 %69
    %71 = vset.pattern.permute.xlu0 2
    %72 = vperm.xlu0 %71, %v17
    %v73 = vpop.permute.xlu0 %72
    %vm74 = vcmp.eq.s32.totalorder %v19, %v67
    %vm75 = vcmp.eq.s32.totalorder %v19, %v70
    %vm76 = vcmp.eq.s32.totalorder %v19, %v73
    %v77 = vsel %vm74, %v12, 0.0
    %v78 = vsel %vm75, %v13, 0.0
    %v79 = vsel %vm76, %v14, 0.0
    %80 = vadd.xlane.f32.xlu0 %v77
    %v81 = vpop.xlane.xlu0 %80
    %82 = vadd.xlane.f32.xlu0 %v78
    %v83 = vpop.xlane.xlu0 %82
    %v84 = vsel %vm39, %v79, 0.0
    %85 = vadd.xlane.f32.xlu0 %v84
    %v86 = vpop.xlane.xlu0 %85
    %87 = vset.pattern.permute.xlu0 3
    %88 = vperm.xlu0 %87, %v15
    %v89 = vpop.permute.xlu0 %88
    %90 = vset.pattern.permute.xlu0 3
    %91 = vperm.xlu0 %90, %v16
    %v92 = vpop.permute.xlu0 %91
    %93 = vset.pattern.permute.xlu0 3
    %94 = vperm.xlu0 %93, %v17
    %v95 = vpop.permute.xlu0 %94
    %vm96 = vcmp.eq.s32.totalorder %v19, %v89
    %vm97 = vcmp.eq.s32.totalorder %v19, %v92
    %vm98 = vcmp.eq.s32.totalorder %v19, %v95
    %v99 = vsel %vm96, %v12, 0.0
    %v100 = vsel %vm97, %v13, 0.0
    %v101 = vsel %vm98, %v14, 0.0
    %102 = vadd.xlane.f32.xlu0 %v99
    %v103 = vpop.xlane.xlu0 %102
    %104 = vadd.xlane.f32.xlu0 %v100
    %v105 = vpop.xlane.xlu0 %104
    %v106 = vsel %vm39, %v101, 0.0
    %107 = vadd.xlane.f32.xlu0 %v106
    %v108 = vpop.xlane.xlu0 %107
    %vm109 = vcmask 7168
    %v110 = vsel %vm109, %v36, %v59
    %v111 = vsel %vm109, %v38, %v61
    %v112 = vsel %vm109, %v42, %v64
    %vm113 = vcmask 15360
    %v114 = vsel %vm113, %v110, %v81
    %v115 = vsel %vm113, %v111, %v83
    %v116 = vsel %vm113, %v112, %v86
    %vm117 = vcmask 23552
    %v118 = vsel %vm117, %v114, %v103
    %v119 = vsel %vm117, %v115, %v105
    %v120 = vsel %vm117, %v116, %v108
    %121 = vset.pattern.permute.xlu0 4
    %122 = vperm.xlu0 %121, %v15
    %v123 = vpop.permute.xlu0 %122
    %124 = vset.pattern.permute.xlu0 4
    %125 = vperm.xlu0 %124, %v16
    %v126 = vpop.permute.xlu0 %125
    %127 = vset.pattern.permute.xlu0 4
    %128 = vperm.xlu0 %127, %v17
    %v129 = vpop.permute.xlu0 %128
    %vm130 = vcmp.eq.s32.totalorder %v19, %v123
    %vm131 = vcmp.eq.s32.totalorder %v19, %v126
    %vm132 = vcmp.eq.s32.totalorder %v19, %v129
    %v133 = vsel %vm130, %v12, 0.0
    %v134 = vsel %vm131, %v13, 0.0
    %v135 = vsel %vm132, %v14, 0.0
    %136 = vadd.xlane.f32.xlu0 %v133
    %v137 = vpop.xlane.xlu0 %136
    %138 = vadd.xlane.f32.xlu0 %v134
    %v139 = vpop.xlane.xlu0 %138
    %v140 = vsel %vm39, %v135, 0.0
    %141 = vadd.xlane.f32.xlu0 %v140
    %v142 = vpop.xlane.xlu0 %141
    %143 = vset.pattern.permute.xlu0 5
    %144 = vperm.xlu0 %143, %v15
    %v145 = vpop.permute.xlu0 %144
    %146 = vset.pattern.permute.xlu0 5
    %147 = vperm.xlu0 %146, %v16
    %v148 = vpop.permute.xlu0 %147
    %149 = vset.pattern.permute.xlu0 5
    %150 = vperm.xlu0 %149, %v17
    %v151 = vpop.permute.xlu0 %150
    %vm152 = vcmp.eq.s32.totalorder %v19, %v145
    %vm153 = vcmp.eq.s32.totalorder %v19, %v148
    %vm154 = vcmp.eq.s32.totalorder %v19, %v151
    %v155 = vsel %vm152, %v12, 0.0
    %v156 = vsel %vm153, %v13, 0.0
    %v157 = vsel %vm154, %v14, 0.0
    %158 = vadd.xlane.f32.xlu0 %v155
    %v159 = vpop.xlane.xlu0 %158
    %160 = vadd.xlane.f32.xlu0 %v156
    %v161 = vpop.xlane.xlu0 %160
    %v162 = vsel %vm39, %v157, 0.0
    %163 = vadd.xlane.f32.xlu0 %v162
    %v164 = vpop.xlane.xlu0 %163
    %165 = vset.pattern.permute.xlu0 6
    %166 = vperm.xlu0 %165, %v15
    %v167 = vpop.permute.xlu0 %166
    %168 = vset.pattern.permute.xlu0 6
    %169 = vperm.xlu0 %168, %v16
    %v170 = vpop.permute.xlu0 %169
    %171 = vset.pattern.permute.xlu0 6
    %172 = vperm.xlu0 %171, %v17
    %v173 = vpop.permute.xlu0 %172
    %vm174 = vcmp.eq.s32.totalorder %v19, %v167
    %vm175 = vcmp.eq.s32.totalorder %v19, %v170
    %vm176 = vcmp.eq.s32.totalorder %v19, %v173
    %v177 = vsel %vm174, %v12, 0.0
    %v178 = vsel %vm175, %v13, 0.0
    %v179 = vsel %vm176, %v14, 0.0
    %180 = vadd.xlane.f32.xlu0 %v177
    %v181 = vpop.xlane.xlu0 %180
    %182 = vadd.xlane.f32.xlu0 %v178
    %v183 = vpop.xlane.xlu0 %182
    %v184 = vsel %vm39, %v179, 0.0
    %185 = vadd.xlane.f32.xlu0 %v184
    %v186 = vpop.xlane.xlu0 %185
    %187 = vset.pattern.permute.xlu0 7
    %188 = vperm.xlu0 %187, %v15
    %v189 = vpop.permute.xlu0 %188
    %190 = vset.pattern.permute.xlu0 7
    %191 = vperm.xlu0 %190, %v16
    %v192 = vpop.permute.xlu0 %191
    %193 = vset.pattern.permute.xlu0 7
    %194 = vperm.xlu0 %193, %v17
    %v195 = vpop.permute.xlu0 %194
    %vm196 = vcmp.eq.s32.totalorder %v19, %v189
    %vm197 = vcmp.eq.s32.totalorder %v19, %v192
    %vm198 = vcmp.eq.s32.totalorder %v19, %v195
    %v199 = vsel %vm196, %v12, 0.0
    %v200 = vsel %vm197, %v13, 0.0
    %v201 = vsel %vm198, %v14, 0.0
    %202 = vadd.xlane.f32.xlu0 %v199
    %v203 = vpop.xlane.xlu0 %202
    %204 = vadd.xlane.f32.xlu0 %v200
    %v205 = vpop.xlane.xlu0 %204
    %v206 = vsel %vm39, %v201, 0.0
    %207 = vadd.xlane.f32.xlu0 %v206
    %v208 = vpop.xlane.xlu0 %207
    %209 = vset.pattern.permute.xlu0 8
    %210 = vperm.xlu0 %209, %v15
    %v211 = vpop.permute.xlu0 %210
    %212 = vset.pattern.permute.xlu0 8
    %213 = vperm.xlu0 %212, %v16
    %v214 = vpop.permute.xlu0 %213
    %215 = vset.pattern.permute.xlu0 8
    %216 = vperm.xlu0 %215, %v17
    %v217 = vpop.permute.xlu0 %216
    %vm218 = vcmp.eq.s32.totalorder %v19, %v211
    %vm219 = vcmp.eq.s32.totalorder %v19, %v214
    %vm220 = vcmp.eq.s32.totalorder %v19, %v217
    %v221 = vsel %vm218, %v12, 0.0
    %v222 = vsel %vm219, %v13, 0.0
    %v223 = vsel %vm220, %v14, 0.0
    %224 = vadd.xlane.f32.xlu0 %v221
    %v225 = vpop.xlane.xlu0 %224
    %226 = vadd.xlane.f32.xlu0 %v222
    %v227 = vpop.xlane.xlu0 %226
    %v228 = vsel %vm39, %v223, 0.0
    %229 = vadd.xlane.f32.xlu0 %v228
    %v230 = vpop.xlane.xlu0 %229
    %231 = vset.pattern.permute.xlu0 9
    %232 = vperm.xlu0 %231, %v15
    %v233 = vpop.permute.xlu0 %232
    %234 = vset.pattern.permute.xlu0 9
    %235 = vperm.xlu0 %234, %v16
    %v236 = vpop.permute.xlu0 %235
    %237 = vset.pattern.permute.xlu0 9
    %238 = vperm.xlu0 %237, %v17
    %v239 = vpop.permute.xlu0 %238
    %vm240 = vcmp.eq.s32.totalorder %v19, %v233
    %vm241 = vcmp.eq.s32.totalorder %v19, %v236
    %vm242 = vcmp.eq.s32.totalorder %v19, %v239
    %v243 = vsel %vm240, %v12, 0.0
    %v244 = vsel %vm241, %v13, 0.0
    %v245 = vsel %vm242, %v14, 0.0
    %246 = vadd.xlane.f32.xlu0 %v243
    %v247 = vpop.xlane.xlu0 %246
    %248 = vadd.xlane.f32.xlu0 %v244
    %v249 = vpop.xlane.xlu0 %248
    %v250 = vsel %vm39, %v245, 0.0
    %251 = vadd.xlane.f32.xlu0 %v250
    %v252 = vpop.xlane.xlu0 %251
    %v253 = vsel %vm109, %v137, %v159
    %v254 = vsel %vm109, %v139, %v161
    %v255 = vsel %vm109, %v142, %v164
    %v256 = vsel %vm113, %v253, %v181
    %v257 = vsel %vm113, %v254, %v183
    %v258 = vsel %vm113, %v255, %v186
    %v259 = vsel %vm117, %v256, %v203
    %v260 = vsel %vm117, %v257, %v205
    %v261 = vsel %vm117, %v258, %v208
    %vm262 = vcmask 31744
    %v263 = vsel %vm262, %v259, %v225
    %v264 = vsel %vm262, %v260, %v227
    %v265 = vsel %vm262, %v261, %v230
    %vm266 = vcmask 39936
    %v267 = vsel %vm266, %v263, %v247
    %v268 = vsel %vm266, %v264, %v249
    %v269 = vsel %vm266, %v265, %v252
    %v273 = vcombine.high %v267, %v267
    %v275 = vunpack.c.l.s4 1966171168
    %v276 = vunpack.c.0.s8 %v275
    %v277 = vlaneseq
    %v278 = vshrl.u32 %v277, 7
    %v279 = vsub.s32 %v276, %v278
    %v280 = vrot.slane %v267, %v279
    %v282 = vunpack.c.l.s4 1966171168
    %v283 = vunpack.c.0.s8 %v282
    %v284 = vlaneseq
    %v285 = vshrl.u32 %v284, 7
    %v286 = vsub.s32 %v283, %v285
    %v287 = vrot.slane %v273, %v286
    %v288 = vcombine.high %v280, %v280
    %v289 = vcombine.high %v287, %v287
    %v291 = vunpack.c.l.s4 1966171168
    %v292 = vunpack.c.0.s8 %v291
    %v293 = vlaneseq
    %v294 = vshrl.u32 %v293, 7
    %v295 = vsub.s32 %v292, %v294
    %v296 = vrot.slane %v280, %v295
    %v298 = vunpack.c.l.s4 1966171168
    %v299 = vunpack.c.0.s8 %v298
    %v300 = vlaneseq
    %v301 = vshrl.u32 %v300, 7
    %v302 = vsub.s32 %v299, %v301
    %v303 = vrot.slane %v287, %v302
    %v305 = vunpack.c.l.s4 1966171168
    %v306 = vunpack.c.0.s8 %v305
    %v307 = vlaneseq
    %v308 = vshrl.u32 %v307, 7
    %v309 = vsub.s32 %v306, %v308
    %v310 = vrot.slane %v288, %v309
    %v312 = vunpack.c.l.s4 1966171168
    %v313 = vunpack.c.0.s8 %v312
    %v314 = vlaneseq
    %v315 = vshrl.u32 %v314, 7
    %v316 = vsub.s32 %v313, %v315
    %v317 = vrot.slane %v289, %v316
    %v318 = vcombine.high %v296, %v296
    %v319 = vcombine.high %v303, %v303
    %v320 = vcombine.high %v310, %v310
    %v321 = vcombine.high %v317, %v317
    %v322 = vcombine.high %v268, %v268
    %v324 = vunpack.c.l.s4 1966171168
    %v325 = vunpack.c.0.s8 %v324
    %v326 = vlaneseq
    %v327 = vshrl.u32 %v326, 7
    %v328 = vsub.s32 %v325, %v327
    %v329 = vrot.slane %v268, %v328
    %v331 = vunpack.c.l.s4 1966171168
    %v332 = vunpack.c.0.s8 %v331
    %v333 = vlaneseq
    %v334 = vshrl.u32 %v333, 7
    %v335 = vsub.s32 %v332, %v334
    %v336 = vrot.slane %v322, %v335
    %v337 = vcombine.high %v329, %v329
    %v338 = vcombine.high %v336, %v336
    %v340 = vunpack.c.l.s4 1966171168
    %v341 = vunpack.c.0.s8 %v340
    %v342 = vlaneseq
    %v343 = vshrl.u32 %v342, 7
    %v344 = vsub.s32 %v341, %v343
    %v345 = vrot.slane %v329, %v344
    %v347 = vunpack.c.l.s4 1966171168
    %v348 = vunpack.c.0.s8 %v347
    %v349 = vlaneseq
    %v350 = vshrl.u32 %v349, 7
    %v351 = vsub.s32 %v348, %v350
    %v352 = vrot.slane %v336, %v351
    %v354 = vunpack.c.l.s4 1966171168
    %v355 = vunpack.c.0.s8 %v354
    %v356 = vlaneseq
    %v357 = vshrl.u32 %v356, 7
    %v358 = vsub.s32 %v355, %v357
    %v359 = vrot.slane %v337, %v358
    %v361 = vunpack.c.l.s4 1966171168
    %v362 = vunpack.c.0.s8 %v361
    %v363 = vlaneseq
    %v364 = vshrl.u32 %v363, 7
    %v365 = vsub.s32 %v362, %v364
    %v366 = vrot.slane %v338, %v365
    %v367 = vcombine.high %v345, %v345
    %v368 = vcombine.high %v352, %v352
    %v369 = vcombine.high %v359, %v359
    %v370 = vcombine.high %v366, %v366
    %v372 = vunpack.c.l.s4 1966171168
    %v373 = vunpack.c.0.s8 %v372
    %v374 = vlaneseq
    %v375 = vshrl.u32 %v374, 7
    %v376 = vsub.s32 %v373, %v375
    %v377 = vrot.slane %v269, %v376
    %v378 = vcombine.high %v377, %v377
    %v380 = vunpack.c.l.s4 1966171168
    %v381 = vunpack.c.0.s8 %v380
    %v382 = vlaneseq
    %v383 = vshrl.u32 %v382, 7
    %v384 = vsub.s32 %v381, %v383
    %v385 = vrot.slane %v377, %v384
    %v387 = vunpack.c.l.s4 1966171168
    %v388 = vunpack.c.0.s8 %v387
    %v389 = vlaneseq
    %v390 = vshrl.u32 %v389, 7
    %v391 = vsub.s32 %v388, %v390
    %v392 = vrot.slane %v378, %v391
    %v393 = vcombine.high %v385, %v385
    %v394 = vcombine.high %v392, %v392
    %v395 = vlaneseq
    %v396 = vshrl.u32 %v395, 7
    %v397 = vsub.s32 0, %v396
    %v398 = vrot.slane %v118, %v397
    %400 = vbcast.lane.b32.xlu0 %v398, 256
    %v401 = vpop.permute.xlu0 %400
    %v402 = vlaneseq
    %v403 = vshrl.u32 %v402, 7
    %v404 = vsub.s32 1, %v403
    %v405 = vrot.slane %v118, %v404
    %407 = vbcast.lane.b32.xlu0 %v405, 256
    %v408 = vpop.permute.xlu0 %407
    %v409 = vlaneseq
    %v410 = vshrl.u32 %v409, 7
    %v411 = vsub.s32 2, %v410
    %v412 = vrot.slane %v118, %v411
    %414 = vbcast.lane.b32.xlu0 %v412, 256
    %v415 = vpop.permute.xlu0 %414
    %v416 = vlaneseq
    %v417 = vshrl.u32 %v416, 7
    %v418 = vsub.s32 3, %v417
    %v419 = vrot.slane %v118, %v418
    %421 = vbcast.lane.b32.xlu0 %v419, 256
    %v422 = vpop.permute.xlu0 %421
    %v423 = vlaneseq
    %v424 = vshrl.u32 %v423, 7
    %v425 = vsub.s32 4, %v424
    %v426 = vrot.slane %v118, %v425
    %428 = vbcast.lane.b32.xlu0 %v426, 256
    %v429 = vpop.permute.xlu0 %428
    %v430 = vlaneseq
    %v431 = vshrl.u32 %v430, 7
    %v432 = vsub.s32 5, %v431
    %v433 = vrot.slane %v118, %v432
    %435 = vbcast.lane.b32.xlu0 %v433, 256
    %v436 = vpop.permute.xlu0 %435
    %v437 = vlaneseq
    %v438 = vshrl.u32 %v437, 7
    %v439 = vsub.s32 6, %v438
    %v440 = vrot.slane %v118, %v439
    %442 = vbcast.lane.b32.xlu0 %v440, 256
    %v443 = vpop.permute.xlu0 %442
    %v444 = vlaneseq
    %v445 = vshrl.u32 %v444, 7
    %v446 = vsub.s32 7, %v445
    %v447 = vrot.slane %v118, %v446
    %449 = vbcast.lane.b32.xlu0 %v447, 256
    %v450 = vpop.permute.xlu0 %449
    %v451 = vlaneseq
    %v452 = vshrl.u32 %v451, 7
    %v453 = vsub.s32 0, %v452
    %v454 = vrot.slane %v119, %v453
    %456 = vbcast.lane.b32.xlu0 %v454, 256
    %v457 = vpop.permute.xlu0 %456
    %v458 = vlaneseq
    %v459 = vshrl.u32 %v458, 7
    %v460 = vsub.s32 1, %v459
    %v461 = vrot.slane %v119, %v460
    %463 = vbcast.lane.b32.xlu0 %v461, 256
    %v464 = vpop.permute.xlu0 %463
    %v465 = vlaneseq
    %v466 = vshrl.u32 %v465, 7
    %v467 = vsub.s32 2, %v466
    %v468 = vrot.slane %v119, %v467
    %470 = vbcast.lane.b32.xlu0 %v468, 256
    %v471 = vpop.permute.xlu0 %470
    %v472 = vlaneseq
    %v473 = vshrl.u32 %v472, 7
    %v474 = vsub.s32 3, %v473
    %v475 = vrot.slane %v119, %v474
    %477 = vbcast.lane.b32.xlu0 %v475, 256
    %v478 = vpop.permute.xlu0 %477
    %v479 = vlaneseq
    %v480 = vshrl.u32 %v479, 7
    %v481 = vsub.s32 4, %v480
    %v482 = vrot.slane %v119, %v481
    %484 = vbcast.lane.b32.xlu0 %v482, 256
    %v485 = vpop.permute.xlu0 %484
    %v486 = vlaneseq
    %v487 = vshrl.u32 %v486, 7
    %v488 = vsub.s32 5, %v487
    %v489 = vrot.slane %v119, %v488
    %491 = vbcast.lane.b32.xlu0 %v489, 256
    %v492 = vpop.permute.xlu0 %491
    %v493 = vlaneseq
    %v494 = vshrl.u32 %v493, 7
    %v495 = vsub.s32 6, %v494
    %v496 = vrot.slane %v119, %v495
    %498 = vbcast.lane.b32.xlu0 %v496, 256
    %v499 = vpop.permute.xlu0 %498
    %v500 = vlaneseq
    %v501 = vshrl.u32 %v500, 7
    %v502 = vsub.s32 7, %v501
    %v503 = vrot.slane %v119, %v502
    %505 = vbcast.lane.b32.xlu0 %v503, 256
    %v506 = vpop.permute.xlu0 %505
    %v507 = vlaneseq
    %v508 = vshrl.u32 %v507, 7
    %v509 = vsub.s32 0, %v508
    %v510 = vrot.slane %v120, %v509
    %512 = vbcast.lane.b32.xlu0 %v510, 256
    %v513 = vpop.permute.xlu0 %512
    %v514 = vlaneseq
    %v515 = vshrl.u32 %v514, 7
    %v516 = vsub.s32 1, %v515
    %v517 = vrot.slane %v120, %v516
    %519 = vbcast.lane.b32.xlu0 %v517, 256
    %v520 = vpop.permute.xlu0 %519
    %v521 = vlaneseq
    %v522 = vshrl.u32 %v521, 7
    %v523 = vsub.s32 2, %v522
    %v524 = vrot.slane %v120, %v523
    %526 = vbcast.lane.b32.xlu0 %v524, 256
    %v527 = vpop.permute.xlu0 %526
    %v528 = vlaneseq
    %v529 = vshrl.u32 %v528, 7
    %v530 = vsub.s32 3, %v529
    %v531 = vrot.slane %v120, %v530
    %533 = vbcast.lane.b32.xlu0 %v531, 256
    %v534 = vpop.permute.xlu0 %533
    %v535 = vlaneseq
    %v536 = vshrl.u32 %v535, 7
    %v537 = vsub.s32 0, %v536
    %v538 = vrot.slane %v296, %v537
    %v539 = vlaneseq
    %v540 = vshrl.u32 %v539, 7
    %v541 = vsub.s32 0, %v540
    %v542 = vrot.slane %v310, %v541
    %v543 = vlaneseq
    %v544 = vshrl.u32 %v543, 7
    %v545 = vsub.s32 0, %v544
    %v546 = vrot.slane %v318, %v545
    %v547 = vlaneseq
    %v548 = vshrl.u32 %v547, 7
    %v549 = vsub.s32 0, %v548
    %v550 = vrot.slane %v320, %v549
    %v551 = vlaneseq
    %v552 = vshrl.u32 %v551, 7
    %v553 = vsub.s32 0, %v552
    %v554 = vrot.slane %v303, %v553
    %v555 = vlaneseq
    %v556 = vshrl.u32 %v555, 7
    %v557 = vsub.s32 0, %v556
    %v558 = vrot.slane %v317, %v557
    %v559 = vlaneseq
    %v560 = vshrl.u32 %v559, 7
    %v561 = vsub.s32 0, %v560
    %v562 = vrot.slane %v319, %v561
    %v563 = vlaneseq
    %v564 = vshrl.u32 %v563, 7
    %v565 = vsub.s32 0, %v564
    %v566 = vrot.slane %v321, %v565
    %v567 = vlaneseq
    %v568 = vshrl.u32 %v567, 7
    %v569 = vsub.s32 0, %v568
    %v570 = vrot.slane %v345, %v569
    %v571 = vlaneseq
    %v572 = vshrl.u32 %v571, 7
    %v573 = vsub.s32 0, %v572
    %v574 = vrot.slane %v359, %v573
    %v575 = vlaneseq
    %v576 = vshrl.u32 %v575, 7
    %v577 = vsub.s32 0, %v576
    %v578 = vrot.slane %v367, %v577
    %v579 = vlaneseq
    %v580 = vshrl.u32 %v579, 7
    %v581 = vsub.s32 0, %v580
    %v582 = vrot.slane %v369, %v581
    %v583 = vlaneseq
    %v584 = vshrl.u32 %v583, 7
    %v585 = vsub.s32 0, %v584
    %v586 = vrot.slane %v352, %v585
    %v587 = vlaneseq
    %v588 = vshrl.u32 %v587, 7
    %v589 = vsub.s32 0, %v588
    %v590 = vrot.slane %v366, %v589
    %v591 = vlaneseq
    %v592 = vshrl.u32 %v591, 7
    %v593 = vsub.s32 0, %v592
    %v594 = vrot.slane %v368, %v593
    %v595 = vlaneseq
    %v596 = vshrl.u32 %v595, 7
    %v597 = vsub.s32 0, %v596
    %v598 = vrot.slane %v370, %v597
    %v599 = vlaneseq
    %v600 = vshrl.u32 %v599, 7
    %v601 = vsub.s32 0, %v600
    %v602 = vrot.slane %v385, %v601
    %v603 = vlaneseq
    %v604 = vshrl.u32 %v603, 7
    %v605 = vsub.s32 0, %v604
    %v606 = vrot.slane %v392, %v605
    %v607 = vlaneseq
    %v608 = vshrl.u32 %v607, 7
    %v609 = vsub.s32 0, %v608
    %v610 = vrot.slane %v393, %v609
    %v611 = vlaneseq
    %v612 = vshrl.u32 %v611, 7
    %v613 = vsub.s32 0, %v612
    %v614 = vrot.slane %v394, %v613
    %v635 = vsub.f32 %v538, %v401
    %v636 = vsub.f32 %v542, %v408
    %v637 = vsub.f32 %v546, %v415
    %v638 = vsub.f32 %v550, %v422
    %v639 = vsub.f32 %v554, %v429
    %v640 = vsub.f32 %v558, %v436
    %v641 = vsub.f32 %v562, %v443
    %v642 = vsub.f32 %v566, %v450
    %v643 = vsub.f32 %v570, %v457
    %v644 = vsub.f32 %v574, %v464
    %v645 = vsub.f32 %v578, %v471
    %v646 = vsub.f32 %v582, %v478
    %v647 = vsub.f32 %v586, %v485
    %v648 = vsub.f32 %v590, %v492
    %v649 = vsub.f32 %v594, %v499
    %v650 = vsub.f32 %v598, %v506
    %v651 = vsub.f32 %v602, %v513
    %v652 = vsub.f32 %v606, %v520
    %v653 = vsub.f32 %v610, %v527
    %v654 = vsub.f32 %v614, %v534
    %v655 = vmax.f32 %v635, 0.0
    %v656 = vmax.f32 %v636, 0.0
    %v657 = vmax.f32 %v637, 0.0
    %v658 = vmax.f32 %v638, 0.0
    %v659 = vmax.f32 %v639, 0.0
    %v660 = vmax.f32 %v640, 0.0
    %v661 = vmax.f32 %v641, 0.0
    %v662 = vmax.f32 %v642, 0.0
    %v663 = vmax.f32 %v643, 0.0
    %v664 = vmax.f32 %v644, 0.0
    %v665 = vmax.f32 %v645, 0.0
    %v666 = vmax.f32 %v646, 0.0
    %v667 = vmax.f32 %v647, 0.0
    %v668 = vmax.f32 %v648, 0.0
    %v669 = vmax.f32 %v649, 0.0
    %v670 = vmax.f32 %v650, 0.0
    %v671 = vmax.f32 %v651, 0.0
    %v672 = vmax.f32 %v652, 0.0
    %v673 = vmax.f32 %v653, 0.0
    %v674 = vmax.f32 %v654, 0.0
    %v675 = vand.u32 2147483647, %v635
    %v676 = vand.u32 2147483647, %v636
    %v677 = vand.u32 2147483647, %v637
    %v678 = vand.u32 2147483647, %v638
    %v679 = vand.u32 2147483647, %v639
    %v680 = vand.u32 2147483647, %v640
    %v681 = vand.u32 2147483647, %v641
    %v682 = vand.u32 2147483647, %v642
    %v683 = vand.u32 2147483647, %v643
    %v684 = vand.u32 2147483647, %v644
    %v685 = vand.u32 2147483647, %v645
    %v686 = vand.u32 2147483647, %v646
    %v687 = vand.u32 2147483647, %v647
    %v688 = vand.u32 2147483647, %v648
    %v689 = vand.u32 2147483647, %v649
    %v690 = vand.u32 2147483647, %v650
    %v691 = vand.u32 2147483647, %v651
    %v692 = vand.u32 2147483647, %v652
    %v693 = vand.u32 2147483647, %v653
    %v694 = vand.u32 2147483647, %v654
    %v695 = vsub.f32 0.0, %v675
    %v696 = vsub.f32 0.0, %v676
    %v697 = vsub.f32 0.0, %v677
    %v698 = vsub.f32 0.0, %v678
    %v699 = vsub.f32 0.0, %v679
    %v700 = vsub.f32 0.0, %v680
    %v701 = vsub.f32 0.0, %v681
    %v702 = vsub.f32 0.0, %v682
    %v703 = vsub.f32 0.0, %v683
    %v704 = vsub.f32 0.0, %v684
    %v705 = vsub.f32 0.0, %v685
    %v706 = vsub.f32 0.0, %v686
    %v707 = vsub.f32 0.0, %v687
    %v708 = vsub.f32 0.0, %v688
    %v709 = vsub.f32 0.0, %v689
    %v710 = vsub.f32 0.0, %v690
    %v711 = vsub.f32 0.0, %v691
    %v712 = vsub.f32 0.0, %v692
    %v713 = vsub.f32 0.0, %v693
    %v714 = vsub.f32 0.0, %v694
    %v715 = vmul.f32 %v695, 1.442695
    %v716 = vpow.pop %v715
    %v717 = vmul.f32 %v696, 1.442695
    %v718 = vpow.pop %v717
    %v719 = vmul.f32 %v697, 1.442695
    %v720 = vpow.pop %v719
    %v721 = vmul.f32 %v698, 1.442695
    %v722 = vpow.pop %v721
    %v723 = vmul.f32 %v699, 1.442695
    %v724 = vpow.pop %v723
    %v725 = vmul.f32 %v700, 1.442695
    %v726 = vpow.pop %v725
    %v727 = vmul.f32 %v701, 1.442695
    %v728 = vpow.pop %v727
    %v729 = vmul.f32 %v702, 1.442695
    %v730 = vpow.pop %v729
    %v731 = vmul.f32 %v703, 1.442695
    %v732 = vpow.pop %v731
    %v733 = vmul.f32 %v704, 1.442695
    %v734 = vpow.pop %v733
    %v735 = vmul.f32 %v705, 1.442695
    %v736 = vpow.pop %v735
    %v737 = vmul.f32 %v706, 1.442695
    %v738 = vpow.pop %v737
    %v739 = vmul.f32 %v707, 1.442695
    %v740 = vpow.pop %v739
    %v741 = vmul.f32 %v708, 1.442695
    %v742 = vpow.pop %v741
    %v743 = vmul.f32 %v709, 1.442695
    %v744 = vpow.pop %v743
    %v745 = vmul.f32 %v710, 1.442695
    %v746 = vpow.pop %v745
    %v747 = vmul.f32 %v711, 1.442695
    %v748 = vpow.pop %v747
    %v749 = vmul.f32 %v712, 1.442695
    %v750 = vpow.pop %v749
    %v751 = vmul.f32 %v713, 1.442695
    %v752 = vpow.pop %v751
    %v753 = vmul.f32 %v714, 1.442695
    %v754 = vpow.pop %v753
    %v755 = vadd.f32 %v716, 1.0
    %v756 = vlog2.pop %v755
    %v757 = vmul.f32 %v756, 0.6931472
    %v758 = vmul.f32 -0.5, %v716
    %v759 = vadd.f32 %v758, 1.0
    %v760 = vmul.f32 %v759, %v716
    %v761 = vand.u32 2147483647, %v716
    %vm762 = vcmp.lt.f32.partialorder %v761, 0.0004427343
    %v763 = vsel %vm762, %v760, %v757
    %v764 = vadd.f32 %v718, 1.0
    %v765 = vlog2.pop %v764
    %v766 = vmul.f32 %v765, 0.6931472
    %v767 = vmul.f32 -0.5, %v718
    %v768 = vadd.f32 %v767, 1.0
    %v769 = vmul.f32 %v768, %v718
    %v770 = vand.u32 2147483647, %v718
    %vm771 = vcmp.lt.f32.partialorder %v770, 0.0004427343
    %v772 = vsel %vm771, %v769, %v766
    %v773 = vadd.f32 %v720, 1.0
    %v774 = vlog2.pop %v773
    %v775 = vmul.f32 %v774, 0.6931472
    %v776 = vmul.f32 -0.5, %v720
    %v777 = vadd.f32 %v776, 1.0
    %v778 = vmul.f32 %v777, %v720
    %v779 = vand.u32 2147483647, %v720
    %vm780 = vcmp.lt.f32.partialorder %v779, 0.0004427343
    %v781 = vsel %vm780, %v778, %v775
    %v782 = vadd.f32 %v722, 1.0
    %v783 = vlog2.pop %v782
    %v784 = vmul.f32 %v783, 0.6931472
    %v785 = vmul.f32 -0.5, %v722
    %v786 = vadd.f32 %v785, 1.0
    %v787 = vmul.f32 %v786, %v722
    %v788 = vand.u32 2147483647, %v722
    %vm789 = vcmp.lt.f32.partialorder %v788, 0.0004427343
    %v790 = vsel %vm789, %v787, %v784
    %v791 = vadd.f32 %v724, 1.0
    %v792 = vlog2.pop %v791
    %v793 = vmul.f32 %v792, 0.6931472
    %v794 = vmul.f32 -0.5, %v724
    %v795 = vadd.f32 %v794, 1.0
    %v796 = vmul.f32 %v795, %v724
    %v797 = vand.u32 2147483647, %v724
    %vm798 = vcmp.lt.f32.partialorder %v797, 0.0004427343
    %v799 = vsel %vm798, %v796, %v793
    %v800 = vadd.f32 %v726, 1.0
    %v801 = vlog2.pop %v800
    %v802 = vmul.f32 %v801, 0.6931472
    %v803 = vmul.f32 -0.5, %v726
    %v804 = vadd.f32 %v803, 1.0
    %v805 = vmul.f32 %v804, %v726
    %v806 = vand.u32 2147483647, %v726
    %vm807 = vcmp.lt.f32.partialorder %v806, 0.0004427343
    %v808 = vsel %vm807, %v805, %v802
    %v809 = vadd.f32 %v728, 1.0
    %v810 = vlog2.pop %v809
    %v811 = vmul.f32 %v810, 0.6931472
    %v812 = vmul.f32 -0.5, %v728
    %v813 = vadd.f32 %v812, 1.0
    %v814 = vmul.f32 %v813, %v728
    %v815 = vand.u32 2147483647, %v728
    %vm816 = vcmp.lt.f32.partialorder %v815, 0.0004427343
    %v817 = vsel %vm816, %v814, %v811
    %v818 = vadd.f32 %v730, 1.0
    %v819 = vlog2.pop %v818
    %v820 = vmul.f32 %v819, 0.6931472
    %v821 = vmul.f32 -0.5, %v730
    %v822 = vadd.f32 %v821, 1.0
    %v823 = vmul.f32 %v822, %v730
    %v824 = vand.u32 2147483647, %v730
    %vm825 = vcmp.lt.f32.partialorder %v824, 0.0004427343
    %v826 = vsel %vm825, %v823, %v820
    %v827 = vadd.f32 %v732, 1.0
    %v828 = vlog2.pop %v827
    %v829 = vmul.f32 %v828, 0.6931472
    %v830 = vmul.f32 -0.5, %v732
    %v831 = vadd.f32 %v830, 1.0
    %v832 = vmul.f32 %v831, %v732
    %v833 = vand.u32 2147483647, %v732
    %vm834 = vcmp.lt.f32.partialorder %v833, 0.0004427343
    %v835 = vsel %vm834, %v832, %v829
    %v836 = vadd.f32 %v734, 1.0
    %v837 = vlog2.pop %v836
    %v838 = vmul.f32 %v837, 0.6931472
    %v839 = vmul.f32 -0.5, %v734
    %v840 = vadd.f32 %v839, 1.0
    %v841 = vmul.f32 %v840, %v734
    %v842 = vand.u32 2147483647, %v734
    %vm843 = vcmp.lt.f32.partialorder %v842, 0.0004427343
    %v844 = vsel %vm843, %v841, %v838
    %v845 = vadd.f32 %v736, 1.0
    %v846 = vlog2.pop %v845
    %v847 = vmul.f32 %v846, 0.6931472
    %v848 = vmul.f32 -0.5, %v736
    %v849 = vadd.f32 %v848, 1.0
    %v850 = vmul.f32 %v849, %v736
    %v851 = vand.u32 2147483647, %v736
    %vm852 = vcmp.lt.f32.partialorder %v851, 0.0004427343
    %v853 = vsel %vm852, %v850, %v847
    %v854 = vadd.f32 %v738, 1.0
    %v855 = vlog2.pop %v854
    %v856 = vmul.f32 %v855, 0.6931472
    %v857 = vmul.f32 -0.5, %v738
    %v858 = vadd.f32 %v857, 1.0
    %v859 = vmul.f32 %v858, %v738
    %v860 = vand.u32 2147483647, %v738
    %vm861 = vcmp.lt.f32.partialorder %v860, 0.0004427343
    %v862 = vsel %vm861, %v859, %v856
    %v863 = vadd.f32 %v740, 1.0
    %v864 = vlog2.pop %v863
    %v865 = vmul.f32 %v864, 0.6931472
    %v866 = vmul.f32 -0.5, %v740
    %v867 = vadd.f32 %v866, 1.0
    %v868 = vmul.f32 %v867, %v740
    %v869 = vand.u32 2147483647, %v740
    %vm870 = vcmp.lt.f32.partialorder %v869, 0.0004427343
    %v871 = vsel %vm870, %v868, %v865
    %v872 = vadd.f32 %v742, 1.0
    %v873 = vlog2.pop %v872
    %v874 = vmul.f32 %v873, 0.6931472
    %v875 = vmul.f32 -0.5, %v742
    %v876 = vadd.f32 %v875, 1.0
    %v877 = vmul.f32 %v876, %v742
    %v878 = vand.u32 2147483647, %v742
    %vm879 = vcmp.lt.f32.partialorder %v878, 0.0004427343
    %v880 = vsel %vm879, %v877, %v874
    %v881 = vadd.f32 %v744, 1.0
    %v882 = vlog2.pop %v881
    %v883 = vmul.f32 %v882, 0.6931472
    %v884 = vmul.f32 -0.5, %v744
    %v885 = vadd.f32 %v884, 1.0
    %v886 = vmul.f32 %v885, %v744
    %v887 = vand.u32 2147483647, %v744
    %vm888 = vcmp.lt.f32.partialorder %v887, 0.0004427343
    %v889 = vsel %vm888, %v886, %v883
    %v890 = vadd.f32 %v746, 1.0
    %v891 = vlog2.pop %v890
    %v892 = vmul.f32 %v891, 0.6931472
    %v893 = vmul.f32 -0.5, %v746
    %v894 = vadd.f32 %v893, 1.0
    %v895 = vmul.f32 %v894, %v746
    %v896 = vand.u32 2147483647, %v746
    %vm897 = vcmp.lt.f32.partialorder %v896, 0.0004427343
    %v898 = vsel %vm897, %v895, %v892
    %v899 = vadd.f32 %v748, 1.0
    %v900 = vlog2.pop %v899
    %v901 = vmul.f32 %v900, 0.6931472
    %v902 = vmul.f32 -0.5, %v748
    %v903 = vadd.f32 %v902, 1.0
    %v904 = vmul.f32 %v903, %v748
    %v905 = vand.u32 2147483647, %v748
    %vm906 = vcmp.lt.f32.partialorder %v905, 0.0004427343
    %v907 = vsel %vm906, %v904, %v901
    %v908 = vadd.f32 %v750, 1.0
    %v909 = vlog2.pop %v908
    %v910 = vmul.f32 %v909, 0.6931472
    %v911 = vmul.f32 -0.5, %v750
    %v912 = vadd.f32 %v911, 1.0
    %v913 = vmul.f32 %v912, %v750
    %v914 = vand.u32 2147483647, %v750
    %vm915 = vcmp.lt.f32.partialorder %v914, 0.0004427343
    %v916 = vsel %vm915, %v913, %v910
    %v917 = vadd.f32 %v752, 1.0
    %v918 = vlog2.pop %v917
    %v919 = vmul.f32 %v918, 0.6931472
    %v920 = vmul.f32 -0.5, %v752
    %v921 = vadd.f32 %v920, 1.0
    %v922 = vmul.f32 %v921, %v752
    %v923 = vand.u32 2147483647, %v752
    %vm924 = vcmp.lt.f32.partialorder %v923, 0.0004427343
    %v925 = vsel %vm924, %v922, %v919
    %v926 = vadd.f32 %v754, 1.0
    %v927 = vlog2.pop %v926
    %v928 = vmul.f32 %v927, 0.6931472
    %v929 = vmul.f32 -0.5, %v754
    %v930 = vadd.f32 %v929, 1.0
    %v931 = vmul.f32 %v930, %v754
    %v932 = vand.u32 2147483647, %v754
    %vm933 = vcmp.lt.f32.partialorder %v932, 0.0004427343
    %v934 = vsel %vm933, %v931, %v928
    %v935 = vadd.f32 %v655, %v763
    %v936 = vadd.f32 %v656, %v772
    %v937 = vadd.f32 %v657, %v781
    %v938 = vadd.f32 %v658, %v790
    %v939 = vadd.f32 %v659, %v799
    %v940 = vadd.f32 %v660, %v808
    %v941 = vadd.f32 %v661, %v817
    %v942 = vadd.f32 %v662, %v826
    %v943 = vadd.f32 %v663, %v835
    %v944 = vadd.f32 %v664, %v844
    %v945 = vadd.f32 %v665, %v853
    %v946 = vadd.f32 %v666, %v862
    %v947 = vadd.f32 %v667, %v871
    %v948 = vadd.f32 %v668, %v880
    %v949 = vadd.f32 %v669, %v889
    %v950 = vadd.f32 %v670, %v898
    %v951 = vadd.f32 %v671, %v907
    %v952 = vadd.f32 %v672, %v916
    %v953 = vadd.f32 %v673, %v925
    %v954 = vadd.f32 %v674, %v934
    %vm955 = vcmask 44032
    %v956 = vsel %vm955, %v935, 0.0
    %v957 = vsel %vm955, %v936, 0.0
    %v958 = vadd.f32 %v956, %v957
    %v959 = vsel %vm955, %v937, 0.0
    %v960 = vadd.f32 %v958, %v959
    %v961 = vsel %vm955, %v938, 0.0
    %v962 = vadd.f32 %v960, %v961
    %v963 = vsel %vm955, %v939, 0.0
    %v964 = vadd.f32 %v962, %v963
    %v965 = vsel %vm955, %v940, 0.0
    %v966 = vadd.f32 %v964, %v965
    %v967 = vsel %vm955, %v941, 0.0
    %v968 = vadd.f32 %v966, %v967
    %v969 = vsel %vm955, %v942, 0.0
    %v970 = vadd.f32 %v968, %v969
    %v971 = vsel %vm955, %v943, 0.0
    %v972 = vadd.f32 %v970, %v971
    %v973 = vsel %vm955, %v944, 0.0
    %v974 = vadd.f32 %v972, %v973
    %v975 = vsel %vm955, %v945, 0.0
    %v976 = vadd.f32 %v974, %v975
    %v977 = vsel %vm955, %v946, 0.0
    %v978 = vadd.f32 %v976, %v977
    %v979 = vsel %vm955, %v947, 0.0
    %v980 = vadd.f32 %v978, %v979
    %v981 = vsel %vm955, %v948, 0.0
    %v982 = vadd.f32 %v980, %v981
    %v983 = vsel %vm955, %v949, 0.0
    %v984 = vadd.f32 %v982, %v983
    %v985 = vsel %vm955, %v950, 0.0
    %v986 = vadd.f32 %v984, %v985
    %v987 = vsel %vm955, %v951, 0.0
    %v988 = vadd.f32 %v986, %v987
    %v989 = vsel %vm955, %v952, 0.0
    %v990 = vadd.f32 %v988, %v989
    %v991 = vsel %vm955, %v953, 0.0
    %v992 = vadd.f32 %v990, %v991
    %v993 = vsel %vm955, %v954, 0.0
    %v994 = vadd.f32 %v992, %v993
    %995 = vadd.xlane.f32.xlu0 %v994
    %v996 = vpop.xlane.xlu0 %995
    %v997 = vrot.slane %v996, 4
    %v998 = vadd.f32 %v996, %v997
    %v999 = vrot.slane %v998, 2
    %v1000 = vadd.f32 %v998, %v999
    %v1001 = vrot.slane %v1000, 1
    %v1002 = vadd.f32 %v1000, %v1001
    %s1003 = vtos %v1002
    %v1004 = vstv %s1003
    %vm1005 = vcmask 0
    %1006 = vst.msk [vmem:[#allocation2] sm:$0x1] %vm1005, %v1004
    // Predicated region
    $region10: #{tpu_custom_call.1} parent=1 // pred_check
      _
    $region11: #{tpu_custom_call.1} parent=1 // pred_check_branch
      %1008 = sbr.rel (0) target = $region13
    $region12: #{tpu_custom_call.1} parent=1 // pred_region
      %s1010 = ssub.s32 16, 16
      %1011 = vsyncadd [#allocation3], %s1010
      %s1013 = sshll.u32 [#allocation2], 4
      %s1014 = int_to_ptr.vmem [resolvable:$true] %s1013
      %1016 = dma.vmem_to_hbm [thread:$0]  %s1014, 16, %s2, [#allocation3]
    $region13: #{tpu_custom_call.1} parent=1 // pred_fallthru
      _
    // Predicated region
    $region14: #{tpu_custom_call.1} parent=1 // pred_check
      _
    $region15: #{tpu_custom_call.1} parent=1 // pred_check_branch
      %1018 = sbr.rel (0) target = $region17
    $region16: #{tpu_custom_call.1} parent=1 // pred_region
      %1019 = dma.done [#allocation3], 16
    $region17: #{tpu_custom_call.1} parent=1 // pred_fallthru
      _
    %1020 = vsyncpa [#allocation3], 1

</llo_original>
